<compile_context>
chip_gen: v6e
topology: v6e:2x2x1
jax: 0.10.0
libtpu: 0.0.40
codegen_flags: <defaults>
</compile_context>

<pallas_src>
import jax
import jax.numpy as jnp
from jax.experimental import pallas as pl
from jax.experimental.pallas import tpu as pltpu


def _attention_lbsa_kernel(x_ref, mask_ref, w_ref, b_ref, ctx_ref, out_ref, a_ref):
    bB, S, F = x_ref.shape
    compute_dtype = x_ref.dtype

    x3 = x_ref[...]                                      # (bB, S, F) native dtype

    # ---- e = tanh(x @ W + b): MXU matmul, f32 accumulation --------------------
    x2 = x3.reshape(bB * S, F)                           # merge leading (non-lane) dims
    e = jnp.dot(x2, w_ref[...], preferred_element_type=jnp.float32)   # (bB*S, F) f32
    e = jnp.tanh(e + b_ref[...])                         # bias (1, F) broadcast, f32

    # ---- scores = e @ context -> (bB, S): lane reduction over F ---------------
    e3 = e.reshape(bB, S, F)
    scores = jnp.sum(e3 * ctx_ref[...], axis=-1)         # (bB, S) f32

    # ---- masked softmax over the step dim -------------------------------------
    m = mask_ref[...]                                     # (bB, S) f32 {0, 1}
    scores = jnp.where(m > 0.0, scores, -jnp.inf)         # eij[~mask] = -inf
    smax = jnp.max(scores, axis=1, keepdims=True)         # (bB, 1)
    ex = jnp.exp(scores - smax)
    denom = jnp.sum(ex, axis=1, keepdims=True)            # (bB, 1)
    a = ex * pl.reciprocal(denom, approx=False)           # exact; approx=True is cheaper
    a_ref[...] = a.astype(a_ref.dtype)

    # ---- out[b, f] = sum_s a[b, s] * x[b, s, f] as a batched MXU matmul -------
    a3 = a.astype(compute_dtype)[:, None, :]              # (bB, 1, S)
    out = jnp.einsum("bqs,bsf->bqf", a3, x3,
                     preferred_element_type=jnp.float32)  # (bB, 1, F) f32
    out_ref[...] = out[:, 0, :].astype(out_ref.dtype)


def _pick_block_b(batch, step, feat, itemsize, vmem_budget_bytes=8 << 20):
    """Largest batch tile s.t. the double-buffered x block + f32 intermediates
    stay within a conservative per-step VMEM budget (safe on v5e/v6e/v7x)."""
    per_row_bytes = step * feat * (2 * itemsize + 12)     # 2x x (dbl-buffered) + ~3 f32 temps
    bb = max(1, int(vmem_budget_bytes // max(per_row_bytes, 1)))
    if bb >= batch:
        return batch                                      # full dim: no (8,128) constraint
    bb = max(8, (bb // 8) * 8)                            # partial 2nd-last dim: multiple of 8
    return min(bb, batch)


def attention_lbsa(x, mask, weight, bias, context, *, block_b=None,
                   vmem_budget_bytes=8 << 20):
    """x: (B,S,F); mask: (B,S) {0,1}; weight: (F,F); bias: (F,); context: (F,1).

    Returns (weighted_sum (B, F), attention a (B, S)) in x's compute dtype.
    """
    B, S, F = x.shape
    compute_dtype = jnp.bfloat16 if x.dtype == jnp.bfloat16 else jnp.float32
    x = x.astype(compute_dtype)
    w = weight.astype(compute_dtype)                      # MXU operands match x's dtype
    b_row = bias.reshape(1, F).astype(jnp.float32)        # elementwise math stays f32
    ctx_row = context.reshape(1, F).astype(jnp.float32)   # context_vector^T as a row
    mask = mask.astype(jnp.float32)

    if block_b is None:
        block_b = _pick_block_b(B, S, F, jnp.dtype(compute_dtype).itemsize,
                                vmem_budget_bytes)
    grid = (pl.cdiv(B, block_b),)

    out_shape = (
        jax.ShapeDtypeStruct((B, F), x.dtype),
        jax.ShapeDtypeStruct((B, S), x.dtype),
    )

    in_specs = [
        pl.BlockSpec((block_b, S, F), lambda i: (i, 0, 0)),   # x: tiled over batch
        pl.BlockSpec((block_b, S), lambda i: (i, 0)),         # mask
        pl.BlockSpec((F, F), lambda i: (0, 0)),               # W (replicated)
        pl.BlockSpec((1, F), lambda i: (0, 0)),               # bias row
        pl.BlockSpec((1, F), lambda i: (0, 0)),               # context row
    ]
    out_specs = (
        pl.BlockSpec((block_b, F), lambda i: (i, 0)),         # weighted sum
        pl.BlockSpec((block_b, S), lambda i: (i, 0)),         # attention a
    )

    itemsize = jnp.dtype(compute_dtype).itemsize
    flops = 2 * B * S * F * F + 2 * B * S * F + 2 * B * S * F
    transcendentals = B * S * F + B * S                   # tanh + exp
    bytes_accessed = (B * S * F * itemsize + B * S * 4 + F * F * itemsize
                      + 2 * F * 4 + B * F * itemsize + B * S * itemsize)

    fn = pl.pallas_call(
        _attention_lbsa_kernel,
        out_shape=out_shape,
        grid_spec=pltpu.PrefetchScalarGridSpec(
            num_scalar_prefetch=0,
            grid=grid,
            in_specs=in_specs,
            out_specs=out_specs,
        ),
        compiler_params=pltpu.CompilerParams(
            dimension_semantics=("parallel",),            # shard batch tiles across TCs (v7x)
            vmem_limit_bytes=32 * 1024 * 1024,            # safe on v5e/v6e/v7x
        ),
        cost_estimate=pl.CostEstimate(
            flops=flops,
            transcendentals=transcendentals,
            bytes_accessed=bytes_accessed,
        ),
    )
    return fn(x, mask, w, b_row, ctx_row)


def _reference(x, mask, weight, bias, context):
    B, S, F = x.shape
    e = jnp.tanh(x.reshape(-1, F) @ weight + bias)
    e = (e @ context).reshape(B, S)
    e = jnp.where(mask > 0.0, e, -jnp.inf)
    a = jax.nn.softmax(e, axis=1)
    return jnp.sum(x * a[:, :, None], axis=1), a


if __name__ == "__main__":
    B, S, F = 2, 8, 32  # batch=2, step_dim=8, feature_dim=32

    key = jax.random.PRNGKey(0)
    kx, kw, kc = jax.random.split(key, 3)

    x = jax.random.normal(kx, (B, S, F), dtype=jnp.float32)

    # xavier_uniform_ for weight (F, F): bound = sqrt(6 / (F + F))
    w_bound = (6.0 / (F + F)) ** 0.5
    weight = jax.random.uniform(kw, (F, F), minval=-w_bound, maxval=w_bound,
                                dtype=jnp.float32)

    # xavier_uniform_ for context_vector (F, 1): bound = sqrt(6 / (F + 1))
    c_bound = (6.0 / (F + 1)) ** 0.5
    context = jax.random.uniform(kc, (F, 1), minval=-c_bound, maxval=c_bound,
                                 dtype=jnp.float32)

    bias = jnp.zeros((F,), dtype=jnp.float32)

    # mask: every row has at least one valid step (all-masked rows give NaN in
    # PyTorch too — semantics preserved; guard upstream if such rows can occur).
    mask = jnp.ones((B, S), dtype=jnp.float32)
    mask = mask.at[1, S - 2:].set(0.0)

    out, a = attention_lbsa(x, mask, weight, bias, context)
    out = jax.block_until_ready(out)
    a = jax.block_until_ready(a)

    ref_out, ref_a = _reference(x, mask, weight, bias, context)
    assert jnp.allclose(out, ref_out, atol=1e-5, rtol=1e-5)
    assert jnp.allclose(a, ref_a, atol=1e-5, rtol=1e-5)

    print("KERNEL_OK")
</pallas_src>

<mosaic_0001>
module attributes {stable_mosaic.version = 11 : i64} {
  func.func @_attention_lbsa_kernel(%arg0: i32, %arg1: memref<2x8x32xf32, #tpu.memory_space<vmem>>, %arg2: memref<2x8xf32, #tpu.memory_space<vmem>>, %arg3: memref<32x32xf32, #tpu.memory_space<vmem>>, %arg4: memref<1x32xf32, #tpu.memory_space<vmem>>, %arg5: memref<1x32xf32, #tpu.memory_space<vmem>>, %arg6: memref<2x32xf32, #tpu.memory_space<vmem>>, %arg7: memref<2x8xf32, #tpu.memory_space<vmem>>) attributes {dimension_semantics = [#tpu.dimension_semantics<parallel>], iteration_bounds = array<i64: 1>, scalar_prefetch = 0 : i64, scratch_operands = 0 : i64, tpu.core_type = #tpu.core_type<tc>, window_params = [{transform_indices = @transform_0, window_bounds = array<i64: 2, 8, 32>}, {transform_indices = @transform_1, window_bounds = array<i64: 2, 8>}, {pipeline_mode = #tpu.pipeline_mode<synchronous>, transform_indices = @transform_2, window_bounds = array<i64: 32, 32>}, {pipeline_mode = #tpu.pipeline_mode<synchronous>, transform_indices = @transform_3, window_bounds = array<i64: 1, 32>}, {pipeline_mode = #tpu.pipeline_mode<synchronous>, transform_indices = @transform_4, window_bounds = array<i64: 1, 32>}, {transform_indices = @transform_5, window_bounds = array<i64: 2, 32>}, {transform_indices = @transform_6, window_bounds = array<i64: 2, 8>}]} {
    %c0 = arith.constant 0 : index
    %c0_0 = arith.constant 0 : index
    %c0_1 = arith.constant 0 : index
    %0 = vector.load %arg1[%c0, %c0_0, %c0_1] : memref<2x8x32xf32, #tpu.memory_space<vmem>>, vector<2x8x32xf32>
    %1 = vector.shape_cast %0 : vector<2x8x32xf32> to vector<16x32xf32>
    %c0_2 = arith.constant 0 : index
    %c0_3 = arith.constant 0 : index
    %2 = vector.load %arg3[%c0_2, %c0_3] : memref<32x32xf32, #tpu.memory_space<vmem>>, vector<32x32xf32>
    %cst = arith.constant dense<0.000000e+00> : vector<16x32xf32>
    %3 = tpu.matmul %1, %2, %cst {dimension_numbers = #tpu.dot_dimension_numbers<[1], [0], [0], [1], [0, 0, 1, 1], [], []>} : vector<16x32xf32>, vector<32x32xf32>, vector<16x32xf32> -> vector<16x32xf32>
    %c0_4 = arith.constant 0 : index
    %c0_5 = arith.constant 0 : index
    %4 = vector.load %arg4[%c0_4, %c0_5] : memref<1x32xf32, #tpu.memory_space<vmem>>, vector<1x32xf32>
    %5 = vector.broadcast %4 : vector<1x32xf32> to vector<16x32xf32>
    %6 = arith.addf %3, %5 : vector<16x32xf32>
    %7 = math.tanh %6 : vector<16x32xf32>
    %8 = vector.shape_cast %7 : vector<16x32xf32> to vector<2x8x32xf32>
    %c0_6 = arith.constant 0 : index
    %c0_7 = arith.constant 0 : index
    %9 = vector.load %arg5[%c0_6, %c0_7] : memref<1x32xf32, #tpu.memory_space<vmem>>, vector<1x32xf32>
    %10 = vector.shape_cast %9 : vector<1x32xf32> to vector<1x1x32xf32>
    %11 = vector.broadcast %10 : vector<1x1x32xf32> to vector<2x8x32xf32>
    %12 = arith.mulf %8, %11 : vector<2x8x32xf32>
    %cst_8 = arith.constant dense<0.000000e+00> : vector<2x8xf32>
    %13 = vector.multi_reduction <add>, %12, %cst_8 [2] : vector<2x8x32xf32> to vector<2x8xf32>
    %c0_9 = arith.constant 0 : index
    %c0_10 = arith.constant 0 : index
    %14 = vector.load %arg2[%c0_9, %c0_10] : memref<2x8xf32, #tpu.memory_space<vmem>>, vector<2x8xf32>
    %cst_11 = arith.constant 0.000000e+00 : f32
    %15 = vector.broadcast %cst_11 : f32 to vector<2x8xf32>
    %16 = arith.cmpf ogt, %14, %15 : vector<2x8xf32>
    %cst_12 = arith.constant 0xFF800000 : f32
    %17 = vector.broadcast %cst_12 : f32 to vector<2x8xf32>
    %18 = arith.select %16, %13, %17 : vector<2x8xi1>, vector<2x8xf32>
    %cst_13 = arith.constant dense<0xFF800000> : vector<2xf32>
    %19 = vector.multi_reduction <maximumf>, %18, %cst_13 [1] : vector<2x8xf32> to vector<2xf32>
    %20 = vector.shape_cast %19 : vector<2xf32> to vector<2x1xf32>
    %21 = vector.broadcast %20 : vector<2x1xf32> to vector<2x8xf32>
    %22 = arith.subf %18, %21 : vector<2x8xf32>
    %23 = math.exp %22 : vector<2x8xf32>
    %cst_14 = arith.constant dense<0.000000e+00> : vector<2xf32>
    %24 = vector.multi_reduction <add>, %23, %cst_14 [1] : vector<2x8xf32> to vector<2xf32>
    %25 = vector.shape_cast %24 : vector<2xf32> to vector<2x1xf32>
    %26 = tpu.reciprocal %25 : vector<2x1xf32> -> vector<2x1xf32>
    %27 = vector.broadcast %26 : vector<2x1xf32> to vector<2x8xf32>
    %28 = arith.mulf %23, %27 : vector<2x8xf32>
    %c0_15 = arith.constant 0 : index
    %c0_16 = arith.constant 0 : index
    %29 = vector.load %arg7[%c0_15, %c0_16] : memref<2x8xf32, #tpu.memory_space<vmem>>, vector<2x8xf32>
    tpu.vector_store %arg7[%c0_15, %c0_16], %28 {strides = array<i32>} : memref<2x8xf32, #tpu.memory_space<vmem>>, vector<2x8xf32>,
    %30 = vector.shape_cast %28 : vector<2x8xf32> to vector<2x1x8xf32>
    "tpu.trace_start"() <{level = 10 : i32, message = "bqs,bsf->bqf"}> : () -> ()
    %cst_17 = arith.constant dense<0.000000e+00> : vector<2x1x32xf32>
    %31 = tpu.matmul %30, %0, %cst_17 {dimension_numbers = #tpu.dot_dimension_numbers<[2], [1], [1], [2], [0, 0, 0, 1, 1, 2], [0], [0]>} : vector<2x1x8xf32>, vector<2x8x32xf32>, vector<2x1x32xf32> -> vector<2x1x32xf32>
    "tpu.trace_stop"() : () -> ()
    %32 = vector.shape_cast %31 : vector<2x1x32xf32> to vector<2x32xf32>
    %c0_18 = arith.constant 0 : index
    %c0_19 = arith.constant 0 : index
    %33 = vector.load %arg6[%c0_18, %c0_19] : memref<2x32xf32, #tpu.memory_space<vmem>>, vector<2x32xf32>
    tpu.vector_store %arg6[%c0_18, %c0_19], %32 {strides = array<i32>} : memref<2x32xf32, #tpu.memory_space<vmem>>, vector<2x32xf32>,
    return
  }
  func.func @transform_0(%arg0: i32) -> (i32, i32, i32) {
    %c0_i32 = arith.constant 0 : i32
    %c0_i32_0 = arith.constant 0 : i32
    %c0_i32_1 = arith.constant 0 : i32
    return %arg0, %c0_i32, %c0_i32_0 : i32, i32, i32
  }
  func.func @transform_1(%arg0: i32) -> (i32, i32) {
    %c0_i32 = arith.constant 0 : i32
    %c0_i32_0 = arith.constant 0 : i32
    return %arg0, %c0_i32 : i32, i32
  }
  func.func @transform_2(%arg0: i32) -> (i32, i32) {
    %c0_i32 = arith.constant 0 : i32
    %c0_i32_0 = arith.constant 0 : i32
    %c0_i32_1 = arith.constant 0 : i32
    return %c0_i32, %c0_i32_0 : i32, i32
  }
  func.func @transform_3(%arg0: i32) -> (i32, i32) {
    %c0_i32 = arith.constant 0 : i32
    %c0_i32_0 = arith.constant 0 : i32
    %c0_i32_1 = arith.constant 0 : i32
    return %c0_i32, %c0_i32_0 : i32, i32
  }
  func.func @transform_4(%arg0: i32) -> (i32, i32) {
    %c0_i32 = arith.constant 0 : i32
    %c0_i32_0 = arith.constant 0 : i32
    %c0_i32_1 = arith.constant 0 : i32
    return %c0_i32, %c0_i32_0 : i32, i32
  }
  func.func @transform_5(%arg0: i32) -> (i32, i32) {
    %c0_i32 = arith.constant 0 : i32
    %c0_i32_0 = arith.constant 0 : i32
    return %arg0, %c0_i32 : i32, i32
  }
  func.func @transform_6(%arg0: i32) -> (i32, i32) {
    %c0_i32 = arith.constant 0 : i32
    %c0_i32_0 = arith.constant 0 : i32
    return %arg0, %c0_i32 : i32, i32
  }
}

</mosaic_0001>

<llo_original>
// kernel: tpu_custom_call.1
$region0: #{tpu_custom_call.1}
  #allocation0 [shape = 'u32[]', space=smem, size = 0x4, offset = 0x4, fixed_abs, tag = 'smem constant byte address 0x4 - core index']
  #allocation1 [shape = 'u32[144,128]{1,0:T(1,128)}', space=vmem, size = 0x12000, scoped, tag = 'internal scratch']
  %s0 = inlined_call_operand.hbm [shape: f32[2,8,32], index: 0, kind: input, shape index: {}]
  %s1 = inlined_call_operand.hbm [shape: f32[2,8], index: 1, kind: input, shape index: {}]
  %s2 = inlined_call_operand.hbm [shape: f32[32,32], index: 2, kind: input, shape index: {}]
  %s3 = inlined_call_operand.vmem [shape: f32[1,32], index: 3, kind: input, shape index: {}]
  %s4 = inlined_call_operand.vmem [shape: f32[1,32], index: 4, kind: input, shape index: {}]
  %s5 = inlined_call_operand.hbm [shape: f32[2,32], index: 5, kind: output, shape index: {0}]
  %s6 = inlined_call_operand.hbm [shape: f32[2,8], index: 6, kind: output, shape index: {1}]
  %7 = xla_tuple %s5, %s6
  %s8 = sld [smem:[#allocation0]]
  $region50: #{tpu_custom_call.1} parent=0
    _
  %s10 = ssub.s32 1, %s8
  %s11 = scalar_select 0, %s10, %s8
  $region1: #{tpu_custom_call.1} parent=0
    #allocation2 [shape = 'u8[8192]{0}', space=vmem, size = 0x2000, scoped, tag = 'input window, operand 0, single buffered']
    #allocation3 [shape = 's32[1]{0}', space=sflag, size = 0x4, scoped, tag = 'scoped memory for tpu_custom_call.1']
    #allocation4 [shape = 's32[1]{0}', space=sflag, size = 0x4, scoped, tag = 'scoped memory for tpu_custom_call.1']
    #allocation5 [shape = 'u8[1024]{0}', space=vmem, size = 0x400, scoped, tag = 'input window, operand 1, single buffered']
    #allocation6 [shape = 's32[1]{0}', space=sflag, size = 0x4, scoped, tag = 'scoped memory for tpu_custom_call.1']
    #allocation7 [shape = 'u8[16384]{0}', space=vmem, size = 0x4000, scoped, tag = 'input window, operand 2, single buffered']
    #allocation8 [shape = 'u8[1024]{0}', space=vmem, size = 0x400, scoped, tag = 'output window, operand 0, single buffered']
    #allocation9 [shape = 'u8[1024]{0}', space=vmem, size = 0x400, scoped, tag = 'output window, operand 1, single buffered']
    #allocation10 [shape = 's32[1]{0}', space=sflag, size = 0x4, scoped, tag = 'scoped memory for tpu_custom_call.1']
    %12 = vsyncpa [#allocation3], 0
    %13 = vsyncpa [#allocation6], 0
    %14 = vsyncpa [#allocation4], 0
    %15 = vsyncpa [#allocation10], 0
    // Predicated region
    $region2: #{tpu_custom_call.1} parent=1 // pred_check
      _
    $region3: #{tpu_custom_call.1} parent=1 // pred_check_branch
      %17 = sbr.rel (0) target = $region5
    $region4: #{tpu_custom_call.1} parent=1 // pred_region
      %s19 = ssub.s32 256, 256
      %20 = vsyncadd [#allocation3], %s19
      %s21 = sshll.u32 [#allocation2], 4
      %s22 = int_to_ptr.vmem [resolvable:$true] %s21
      %27 = dma.hbm_to_vmem [thread:$0]  %s0, 256, %s22, [#allocation3], 128, 128, 8
    $region5: #{tpu_custom_call.1} parent=1 // pred_fallthru
      _
    // Predicated region
    $region6: #{tpu_custom_call.1} parent=1 // pred_check
      _
    $region7: #{tpu_custom_call.1} parent=1 // pred_check_branch
      %29 = sbr.rel (0) target = $region9
    $region8: #{tpu_custom_call.1} parent=1 // pred_region
      %s31 = ssub.s32 32, 32
      %32 = vsyncadd [#allocation6], %s31
      %s34 = sshll.u32 [#allocation5], 4
      %s35 = int_to_ptr.vmem [resolvable:$true] %s34
      %37 = dma.hbm_to_vmem [thread:$0]  %s1, 32, %s35, [#allocation6]
    $region9: #{tpu_custom_call.1} parent=1 // pred_fallthru
      _
    // Predicated region
    $region10: #{tpu_custom_call.1} parent=1 // pred_check
      _
    $region11: #{tpu_custom_call.1} parent=1 // pred_check_branch
      %39 = sbr.rel (0) target = $region13
    $region12: #{tpu_custom_call.1} parent=1 // pred_region
      %s41 = ssub.s32 512, 512
      %42 = vsyncadd [#allocation6], %s41
      %s43 = sshll.u32 [#allocation7], 4
      %s44 = int_to_ptr.vmem [resolvable:$true] %s43
      %49 = dma.hbm_to_vmem [thread:$0]  %s2, 512, %s44, [#allocation6], 128, 128, 8
    $region13: #{tpu_custom_call.1} parent=1 // pred_fallthru
      _
    // Predicated region
    $region14: #{tpu_custom_call.1} parent=1 // pred_check
      _
    $region15: #{tpu_custom_call.1} parent=1 // pred_check_branch
      %51 = sbr.rel (0) target = $region17
    $region16: #{tpu_custom_call.1} parent=1 // pred_region
      _
    $region17: #{tpu_custom_call.1} parent=1 // pred_fallthru
      _
    // Predicated region
    $region18: #{tpu_custom_call.1} parent=1 // pred_check
      _
    $region19: #{tpu_custom_call.1} parent=1 // pred_check_branch
      %53 = sbr.rel (0) target = $region21
    $region20: #{tpu_custom_call.1} parent=1 // pred_region
      _
    $region21: #{tpu_custom_call.1} parent=1 // pred_fallthru
      _
    // Predicated region
    $region22: #{tpu_custom_call.1} parent=1 // pred_check
      _
    $region23: #{tpu_custom_call.1} parent=1 // pred_check_branch
      %55 = sbr.rel (0) target = $region25
    $region24: #{tpu_custom_call.1} parent=1 // pred_region
      %56 = dma.done [#allocation3], 256
    $region25: #{tpu_custom_call.1} parent=1 // pred_fallthru
      _
    // Predicated region
    $region26: #{tpu_custom_call.1} parent=1 // pred_check
      _
    $region27: #{tpu_custom_call.1} parent=1 // pred_check_branch
      %58 = sbr.rel (0) target = $region29
    $region28: #{tpu_custom_call.1} parent=1 // pred_region
      %59 = dma.done [#allocation6], 32
    $region29: #{tpu_custom_call.1} parent=1 // pred_fallthru
      _
    // Predicated region
    $region30: #{tpu_custom_call.1} parent=1 // pred_check
      _
    $region31: #{tpu_custom_call.1} parent=1 // pred_check_branch
      %61 = sbr.rel (0) target = $region33
    $region32: #{tpu_custom_call.1} parent=1 // pred_region
      %62 = dma.done [#allocation6], 512
    $region33: #{tpu_custom_call.1} parent=1 // pred_fallthru
      _
    %v63 = vld [vmem:[#allocation2] sm:$0xff]
    %v64 = vld [vmem:[#allocation2 + $0x8] sm:$0xff]
    %v65 = vld [vmem:[#allocation7] sm:$0xff]
    %v66 = vld [vmem:[#allocation7 + $0x8] sm:$0xff]
    %v67 = vld [vmem:[#allocation7 + $0x10] sm:$0xff]
    %v68 = vld [vmem:[#allocation7 + $0x18] sm:$0xff]
    %v69 = vld [vmem:[%s3] sm:$0x1]
    %v71 = vlaneseq
    %v72 = vshrl.u32 %v71, 7
    %v73 = vsub.s32 0, %v72
    %v74 = vrot.slane %v69, %v73
    %vm76 = vcmask 261120
    %v78 = vsel %vm76, %v63, 0
    %v81 = vsel %vm76, %v64, 0
    %83 = vmatprep.subr.mxu0 0.0
    %84 = vmatpush1.msra.mxu0 0.0
    %85 = vmatprep.subr.mxu0 0.0
    %86 = vmatpush1.msra.mxu0 0.0
    %87 = vmatprep.subr.mxu0 0.0
    %88 = vmatpush1.msra.mxu0 0.0
    %89 = vmatprep.subr.mxu0 0.0
    %90 = vmatpush1.msra.mxu0 0.0
    %91 = vmatprep.subr.mxu0 0.0
    %92 = vmatpush1.msra.mxu0 0.0
    %93 = vmatprep.subr.mxu0 0.0
    %94 = vmatpush1.msra.mxu0 0.0
    %95 = vmatprep.subr.mxu0 0.0
    %96 = vmatpush1.msra.mxu0 0.0
    %97 = vmatprep.subr.mxu0 0.0
    %98 = vmatpush1.msra.mxu0 0.0
    %99 = vmatprep.subr.mxu0 0.0
    %100 = vmatpush1.msra.mxu0 0.0
    %101 = vmatprep.subr.mxu0 0.0
    %102 = vmatpush1.msra.mxu0 0.0
    %103 = vmatprep.subr.mxu0 0.0
    %104 = vmatpush1.msra.mxu0 0.0
    %105 = vmatprep.subr.mxu0 0.0
    %106 = vmatpush1.msra.mxu0 0.0
    %107 = vmatprep.subr.mxu0 0.0
    %108 = vmatpush1.msra.mxu0 %v68
    %109 = vmatprep.subr.mxu0 0.0
    %110 = vmatpush1.msra.mxu0 %v67
    %111 = vmatprep.subr.mxu0 0.0
    %112 = vmatpush1.msra.mxu0 %v66
    %113 = vmatprep.subr.mxu0 0.0
    %114 = vmatpush1.msra.mxu0 %v65
    %115 = vmatprep.subr.mxu0 0.0
    %116 = vmatpush2.msra.mxu0 0.0
    %117 = vmatprep.subr.mxu0 0.0
    %118 = vmatpush2.msra.mxu0 0.0
    %119 = vmatprep.subr.mxu0 0.0
    %120 = vmatpush2.msra.mxu0 0.0
    %121 = vmatprep.subr.mxu0 0.0
    %122 = vmatpush2.msra.mxu0 0.0
    %123 = vmatprep.subr.mxu0 0.0
    %124 = vmatpush2.msra.mxu0 0.0
    %125 = vmatprep.subr.mxu0 0.0
    %126 = vmatpush2.msra.mxu0 0.0
    %127 = vmatprep.subr.mxu0 0.0
    %128 = vmatpush2.msra.mxu0 0.0
    %129 = vmatprep.subr.mxu0 0.0
    %130 = vmatpush2.msra.mxu0 0.0
    %131 = vmatprep.subr.mxu0 0.0
    %132 = vmatpush2.msra.mxu0 0.0
    %133 = vmatprep.subr.mxu0 0.0
    %134 = vmatpush2.msra.mxu0 0.0
    %135 = vmatprep.subr.mxu0 0.0
    %136 = vmatpush2.msra.mxu0 0.0
    %137 = vmatprep.subr.mxu0 0.0
    %138 = vmatpush2.msra.mxu0 0.0
    %139 = vmatprep.subr.mxu0 0.0
    %140 = vmatpush2.msra.mxu0 0.0
    %141 = vmatprep.subr.mxu0 0.0
    %142 = vmatpush2.msra.mxu0 0.0
    %143 = vmatprep.subr.mxu0 0.0
    %144 = vmatpush2.msra.mxu0 0.0
    %145 = vmatprep.subr.mxu0 0.0
    %146 = vmatpush2.msra.mxu0 0.0
    %147 = vmatprep.mubr.f32.mxu0 0.0
    %148 = vmatmul.mubr.f32.gmra.mxu0 %v78
    %v149 = vpop.f32.mrf.mxu0
    %v150 = vadd.f32 %v74, %v149
    %v151 = vpop.f32.mrf.mxu0
    %152 = vmatprep.mubr.f32.mxu0 0.0
    %153 = vmatmul.mubr.f32.gmra.mxu0 %v81
    %v154 = vpop.f32.mrf.mxu0
    %v155 = vadd.f32 %v74, %v154
    %v156 = vpop.f32.mrf.mxu0
    %157 = vdwg.mxu0
    %v158 = vtanh.pop %v150
    %v159 = vtanh.pop %v155
    %v160 = vld [vmem:[%s4] sm:$0x1]
    %v162 = vlaneseq
    %v163 = vshrl.u32 %v162, 7
    %v164 = vsub.s32 0, %v163
    %v165 = vrot.slane %v160, %v164
    %v167 = vmul.f32 %v158, %v165
    %v168 = vmul.f32 %v159, %v165
    %v169 = vsel %vm76, %v167, 0.0
    %170 = vadd.xlane.f32.xlu0 %v169
    %v171 = vpop.xlane.xlu0 %170
    %v172 = vsel %vm76, %v168, 0.0
    %173 = vadd.xlane.f32.xlu0 %v172
    %v174 = vpop.xlane.xlu0 %173
    %v175 = vld [vmem:[#allocation5] sm:$0x3]
    %vm176 = vcmp.gt.f32.partialorder %v175, 0.0
    %v179 = vlaneseq
    %v180 = vand.u32 %v179, 127
    %v181 = vlaneseq
    %v182 = vshrl.u32 %v181, 7
    %v183 = vsub.s32 %v180, %v182
    %v184 = vrot.slane %v171, %v183
    %v185 = vlaneseq
    %v186 = vshrl.u32 %v185, 7
    %v187 = vsub.s32 %v180, %v186
    %v188 = vrot.slane %v174, %v187
    %vm189 = vcmask 1041409
    %v190 = vsel %vm189, %v188, %v184
    %v192 = vsel %vm176, %v190, -inf
    %vm193 = vcmask 58368
    %v194 = vsel %vm193, %v192, -inf
    %195 = vmax.xlane.f32.xlu0 %v194
    %v196 = vpop.xlane.xlu0 %195
    %v197 = vsub.f32 %v192, %v196
    %v198 = vmul.f32 %v197, 1.442695
    %v199 = vpow.pop %v198
    %v200 = vsel %vm193, %v199, 0.0
    %201 = vadd.xlane.f32.xlu0 %v200
    %v202 = vpop.xlane.xlu0 %201
    %v203 = vrcp.pop %v202
    %v204 = vmul.f32 %v199, %v203
    %205 = vst.msk [vmem:[#allocation9] sm:$0x3] %vm193, %v204
    %v208 = vunpack.c.l.s4 1966171168
    %v209 = vunpack.c.0.s8 %v208
    %v210 = vlaneseq
    %v211 = vshrl.u32 %v210, 7
    %v212 = vsub.s32 %v209, %v211
    %v213 = vrot.slane %v204, %v212
    %v214 = vcombine.high %v213, %v213
    %v216 = vunpack.c.l.s4 1966171168
    %v217 = vunpack.c.0.s8 %v216
    %v218 = vlaneseq
    %v219 = vshrl.u32 %v218, 7
    %v220 = vsub.s32 %v217, %v219
    %v221 = vrot.slane %v213, %v220
    %v223 = vunpack.c.l.s4 1966171168
    %v224 = vunpack.c.0.s8 %v223
    %v225 = vlaneseq
    %v226 = vshrl.u32 %v225, 7
    %v227 = vsub.s32 %v224, %v226
    %v228 = vrot.slane %v214, %v227
    %vm229 = vcmask 64512
    %v230 = vsel %vm229, %v221, 0
    %232 = vmatprep.subr.mxu0 0.0
    %233 = vmatpush1.msra.mxu0 0.0
    %234 = vmatprep.subr.mxu0 0.0
    %235 = vmatpush1.msra.mxu0 0.0
    %236 = vmatprep.subr.mxu0 0.0
    %237 = vmatpush1.msra.mxu0 0.0
    %238 = vmatprep.subr.mxu0 0.0
    %239 = vmatpush1.msra.mxu0 0.0
    %240 = vmatprep.subr.mxu0 0.0
    %241 = vmatpush1.msra.mxu0 0.0
    %242 = vmatprep.subr.mxu0 0.0
    %243 = vmatpush1.msra.mxu0 0.0
    %244 = vmatprep.subr.mxu0 0.0
    %245 = vmatpush1.msra.mxu0 0.0
    %246 = vmatprep.subr.mxu0 0.0
    %247 = vmatpush1.msra.mxu0 0.0
    %248 = vmatprep.subr.mxu0 0.0
    %249 = vmatpush1.msra.mxu0 0.0
    %250 = vmatprep.subr.mxu0 0.0
    %251 = vmatpush1.msra.mxu0 0.0
    %252 = vmatprep.subr.mxu0 0.0
    %253 = vmatpush1.msra.mxu0 0.0
    %254 = vmatprep.subr.mxu0 0.0
    %255 = vmatpush1.msra.mxu0 0.0
    %256 = vmatprep.subr.mxu0 0.0
    %257 = vmatpush1.msra.mxu0 0.0
    %258 = vmatprep.subr.mxu0 0.0
    %259 = vmatpush1.msra.mxu0 0.0
    %260 = vmatprep.subr.mxu0 0.0
    %261 = vmatpush1.msra.mxu0 0.0
    %262 = vmatprep.subr.mxu0 0.0
    %263 = vmatpush1.msra.mxu0 %v63
    %264 = vmatprep.subr.mxu0 0.0
    %265 = vmatpush2.msra.mxu0 0.0
    %266 = vmatprep.subr.mxu0 0.0
    %267 = vmatpush2.msra.mxu0 0.0
    %268 = vmatprep.subr.mxu0 0.0
    %269 = vmatpush2.msra.mxu0 0.0
    %270 = vmatprep.subr.mxu0 0.0
    %271 = vmatpush2.msra.mxu0 0.0
    %272 = vmatprep.subr.mxu0 0.0
    %273 = vmatpush2.msra.mxu0 0.0
    %274 = vmatprep.subr.mxu0 0.0
    %275 = vmatpush2.msra.mxu0 0.0
    %276 = vmatprep.subr.mxu0 0.0
    %277 = vmatpush2.msra.mxu0 0.0
    %278 = vmatprep.subr.mxu0 0.0
    %279 = vmatpush2.msra.mxu0 0.0
    %280 = vmatprep.subr.mxu0 0.0
    %281 = vmatpush2.msra.mxu0 0.0
    %282 = vmatprep.subr.mxu0 0.0
    %283 = vmatpush2.msra.mxu0 0.0
    %284 = vmatprep.subr.mxu0 0.0
    %285 = vmatpush2.msra.mxu0 0.0
    %286 = vmatprep.subr.mxu0 0.0
    %287 = vmatpush2.msra.mxu0 0.0
    %288 = vmatprep.subr.mxu0 0.0
    %289 = vmatpush2.msra.mxu0 0.0
    %290 = vmatprep.subr.mxu0 0.0
    %291 = vmatpush2.msra.mxu0 0.0
    %292 = vmatprep.subr.mxu0 0.0
    %293 = vmatpush2.msra.mxu0 0.0
    %294 = vmatprep.subr.mxu0 0.0
    %295 = vmatpush2.msra.mxu0 0.0
    %296 = vmatprep.mubr.f32.mxu0 0.0
    %297 = vmatmul.mubr.f32.gmra.mxu0 %v230
    %v298 = vpop.f32.mrf.mxu0
    %v299 = vadd.f32 0.0, %v298
    %v300 = vpop.f32.mrf.mxu0
    %301 = vdwg.mxu0
    %v302 = vsel %vm229, %v228, 0
    %304 = vmatprep.subr.mxu0 0.0
    %305 = vmatpush1.msra.mxu0 0.0
    %306 = vmatprep.subr.mxu0 0.0
    %307 = vmatpush1.msra.mxu0 0.0
    %308 = vmatprep.subr.mxu0 0.0
    %309 = vmatpush1.msra.mxu0 0.0
    %310 = vmatprep.subr.mxu0 0.0
    %311 = vmatpush1.msra.mxu0 0.0
    %312 = vmatprep.subr.mxu0 0.0
    %313 = vmatpush1.msra.mxu0 0.0
    %314 = vmatprep.subr.mxu0 0.0
    %315 = vmatpush1.msra.mxu0 0.0
    %316 = vmatprep.subr.mxu0 0.0
    %317 = vmatpush1.msra.mxu0 0.0
    %318 = vmatprep.subr.mxu0 0.0
    %319 = vmatpush1.msra.mxu0 0.0
    %320 = vmatprep.subr.mxu0 0.0
    %321 = vmatpush1.msra.mxu0 0.0
    %322 = vmatprep.subr.mxu0 0.0
    %323 = vmatpush1.msra.mxu0 0.0
    %324 = vmatprep.subr.mxu0 0.0
    %325 = vmatpush1.msra.mxu0 0.0
    %326 = vmatprep.subr.mxu0 0.0
    %327 = vmatpush1.msra.mxu0 0.0
    %328 = vmatprep.subr.mxu0 0.0
    %329 = vmatpush1.msra.mxu0 0.0
    %330 = vmatprep.subr.mxu0 0.0
    %331 = vmatpush1.msra.mxu0 0.0
    %332 = vmatprep.subr.mxu0 0.0
    %333 = vmatpush1.msra.mxu0 0.0
    %334 = vmatprep.subr.mxu0 0.0
    %335 = vmatpush1.msra.mxu0 %v64
    %336 = vmatprep.subr.mxu0 0.0
    %337 = vmatpush2.msra.mxu0 0.0
    %338 = vmatprep.subr.mxu0 0.0
    %339 = vmatpush2.msra.mxu0 0.0
    %340 = vmatprep.subr.mxu0 0.0
    %341 = vmatpush2.msra.mxu0 0.0
    %342 = vmatprep.subr.mxu0 0.0
    %343 = vmatpush2.msra.mxu0 0.0
    %344 = vmatprep.subr.mxu0 0.0
    %345 = vmatpush2.msra.mxu0 0.0
    %346 = vmatprep.subr.mxu0 0.0
    %347 = vmatpush2.msra.mxu0 0.0
    %348 = vmatprep.subr.mxu0 0.0
    %349 = vmatpush2.msra.mxu0 0.0
    %350 = vmatprep.subr.mxu0 0.0
    %351 = vmatpush2.msra.mxu0 0.0
    %352 = vmatprep.subr.mxu0 0.0
    %353 = vmatpush2.msra.mxu0 0.0
    %354 = vmatprep.subr.mxu0 0.0
    %355 = vmatpush2.msra.mxu0 0.0
    %356 = vmatprep.subr.mxu0 0.0
    %357 = vmatpush2.msra.mxu0 0.0
    %358 = vmatprep.subr.mxu0 0.0
    %359 = vmatpush2.msra.mxu0 0.0
    %360 = vmatprep.subr.mxu0 0.0
    %361 = vmatpush2.msra.mxu0 0.0
    %362 = vmatprep.subr.mxu0 0.0
    %363 = vmatpush2.msra.mxu0 0.0
    %364 = vmatprep.subr.mxu0 0.0
    %365 = vmatpush2.msra.mxu0 0.0
    %366 = vmatprep.subr.mxu0 0.0
    %367 = vmatpush2.msra.mxu0 0.0
    %368 = vmatprep.mubr.f32.mxu0 0.0
    %369 = vmatmul.mubr.f32.gmra.mxu0 %v302
    %v370 = vpop.f32.mrf.mxu0
    %v371 = vadd.f32 0.0, %v370
    %v372 = vpop.f32.mrf.mxu0
    %373 = vdwg.mxu0
    %v376 = vrot.slane %v371, 7
    %v377 = vsel %vm189, %v376, %v299
    %vm379 = vcmask 254976
    %380 = vst.msk [vmem:[#allocation8] sm:$0x3] %vm379, %v377
    // Predicated region
    $region34: #{tpu_custom_call.1} parent=1 // pred_check
      _
    $region35: #{tpu_custom_call.1} parent=1 // pred_check_branch
      %382 = sbr.rel (0) target = $region37
    $region36: #{tpu_custom_call.1} parent=1 // pred_region
      %s384 = ssub.s32 32, 32
      %385 = vsyncadd [#allocation4], %s384
      %s387 = sshll.u32 [#allocation8], 4
      %s388 = int_to_ptr.vmem [resolvable:$true] %s387
      %390 = dma.vmem_to_hbm [thread:$0]  %s388, 32, %s5, [#allocation4]
    $region37: #{tpu_custom_call.1} parent=1 // pred_fallthru
      _
    // Predicated region
    $region38: #{tpu_custom_call.1} parent=1 // pred_check
      _
    $region39: #{tpu_custom_call.1} parent=1 // pred_check_branch
      %392 = sbr.rel (0) target = $region41
    $region40: #{tpu_custom_call.1} parent=1 // pred_region
      %s394 = ssub.s32 32, 32
      %395 = vsyncadd [#allocation10], %s394
      %s397 = sshll.u32 [#allocation9], 4
      %s398 = int_to_ptr.vmem [resolvable:$true] %s397
      %400 = dma.vmem_to_hbm [thread:$0]  %s398, 32, %s6, [#allocation10]
    $region41: #{tpu_custom_call.1} parent=1 // pred_fallthru
      _
    // Predicated region
    $region42: #{tpu_custom_call.1} parent=1 // pred_check
      _
    $region43: #{tpu_custom_call.1} parent=1 // pred_check_branch
      %402 = sbr.rel (0) target = $region45
    $region44: #{tpu_custom_call.1} parent=1 // pred_region
      %403 = dma.done [#allocation4], 32
    $region45: #{tpu_custom_call.1} parent=1 // pred_fallthru
      _
    // Predicated region
    $region46: #{tpu_custom_call.1} parent=1 // pred_check
      _
    $region47: #{tpu_custom_call.1} parent=1 // pred_check_branch
      %405 = sbr.rel (0) target = $region49
    $region48: #{tpu_custom_call.1} parent=1 // pred_region
      %406 = dma.done [#allocation10], 32
    $region49: #{tpu_custom_call.1} parent=1 // pred_fallthru
      _
    %407 = vsyncpa [#allocation3], 1
    %408 = vsyncpa [#allocation6], 1
    %409 = vsyncpa [#allocation4], 1
    %410 = vsyncpa [#allocation10], 1

</llo_original>
